<compile_context>
chip_gen: v6e
topology: v6e:2x2x1
jax: 0.10.0
libtpu: 0.0.40
codegen_flags: <defaults>
</compile_context>

<pallas_src>
import functools

import jax
import jax.numpy as jnp
from jax.experimental import pallas as pl
from jax.experimental.pallas import tpu as pltpu

LANE = 128
ROW_ALIGN = 16          # bf16 sublane packing for the row (second-to-last) dim


def _round_up(n: int, m: int) -> int:
    return ((n + m - 1) // m) * m


def _pad_dim(d: int) -> int:
    # Lane-align; prefer 256 alignment (v6e/v7x MXUs are 256x256) once past one
    # lane group.  v5e's 128x128 MXU is unaffected by the extra alignment.
    return _round_up(d, 256) if d > LANE else _round_up(d, LANE)


def _vmem_capacity_bytes() -> int:
    try:
        return int(pltpu.get_tpu_info().vmem_capacity_bytes)
    except Exception:
        return 64 << 20          # v7x floor; safe lower bound on every generation


def _estimate_vmem(tm: int, th: int, dp: int, n_h: int, out_itemsize: int) -> int:
    w_bufs = 1 if n_h == 1 else 2          # single-buffered constant weights
    b = 2 * tm * dp * 2                    # x tile (bf16, double-buffered)
    b += w_bufs * dp * (2 * th) * 2        # fused gate|up chunk (bf16)
    b += w_bufs * th * dp * 2              # down-projection chunk (bf16)
    b += 2 * tm * dp * out_itemsize        # output tile (double-buffered)
    b += tm * dp * 4                       # f32 accumulator scratch
    return b


def reglu_kernel(x_ref, wgu_ref, wd_ref, o_ref, acc_ref, *, th: int):
    """One (row-tile, H-chunk) step of  w2( relu(w1 x) * w3 x ).

    x_ref   : (tm, Dp)    bf16  row tile of activations (constant over H axis)
    wgu_ref : (Dp, 2*th)  bf16  [:, :th] gate chunk (w1^T), [:, th:] up chunk (w3^T)
    wd_ref  : (th, Dp)    bf16  down-projection chunk (w2^T)
    o_ref   : (tm, Dp)          written only on the last H chunk
    acc_ref : (tm, Dp)    f32   accumulator scratch (lives across the H axis)
    """
    h = pl.program_id(1)

    @pl.when(h == 0)
    def _():
        acc_ref[...] = jnp.zeros_like(acc_ref)

    x = x_ref[...]
    y = jnp.dot(x, wgu_ref[...], preferred_element_type=jnp.float32)   # (tm, 2*th) f32
    hidden = jnp.maximum(y[:, :th], 0.0) * y[:, th:]                   # ReGLU (VPU)
    acc_ref[...] += jnp.dot(hidden.astype(x.dtype), wd_ref[...],
                            preferred_element_type=jnp.float32)

    @pl.when(h == pl.num_programs(1) - 1)
    def _():
        o_ref[...] = acc_ref[...].astype(o_ref.dtype)


def choose_h_chunk(dim: int, hidden_dim: int, th_max: int = 512) -> int:
    """Pick the H-chunk width (multiple of 128) so weight chunks fit the VMEM budget."""
    dp = _pad_dim(dim)
    th = min(th_max, _round_up(hidden_dim, LANE))
    budget = int(_vmem_capacity_bytes() * 0.45)   # weight chunks may be double-buffered
    while th > LANE and 2 * (dp * 2 * th + th * dp) * 2 > budget:
        th = _round_up(th // 2, LANE)
    return th


def pack_reglu_weights(w1, w3, w2, *, th=None, compute_dtype=jnp.bfloat16):
    """Fuse / pad / transpose the three Linear weights ONCE, outside the hot path.

    w1, w3 : (H, D)  nn.Linear layout (gate / up projections)
    w2     : (D, H)  down projection
    Returns (wgu, wd, th):
      wgu : (Dp, 2*Hp) bf16, chunk-interleaved [g0|u0|g1|u1|...] with chunk width th
      wd  : (Hp, Dp)   bf16
    """
    H, D = w1.shape
    assert w3.shape == (H, D) and w2.shape == (D, H)
    if th is None:
        th = choose_h_chunk(D, H)
    Dp = _pad_dim(D)
    Hp = _round_up(H, th)
    nH = Hp // th

    g = jnp.zeros((Dp, Hp), compute_dtype).at[:D, :H].set(w1.T.astype(compute_dtype))
    u = jnp.zeros((Dp, Hp), compute_dtype).at[:D, :H].set(w3.T.astype(compute_dtype))
    # Interleave gate/up per H-chunk so each grid step loads one contiguous
    # (Dp, 2*th) block -> a single wide MXU matmul per step, lane-aligned split.
    wgu = jnp.stack([g.reshape(Dp, nH, th), u.reshape(Dp, nH, th)],
                    axis=2).reshape(Dp, 2 * Hp)
    wd = jnp.zeros((Hp, Dp), compute_dtype).at[:H, :D].set(w2.T.astype(compute_dtype))
    return wgu, wd, th


def reglu_packed(x, wgu, wd, *, dim, hidden_dim, th, tm=512,
                 out_dtype=None, compute_dtype=jnp.bfloat16):
    """Run the ReGLU kernel on pre-packed weights.  x: (..., dim)."""
    orig_shape = x.shape
    D = dim
    assert orig_shape[-1] == D
    M = x.size // D
    Dp, two_hp = wgu.shape
    Hp = two_hp // 2
    assert Hp >= hidden_dim and Hp % th == 0 and wd.shape == (Hp, Dp)
    nH = Hp // th
    out_dtype = out_dtype or x.dtype
    out_itemsize = jnp.dtype(out_dtype).itemsize

    # Row tile: default 512; shrink for small M and to respect the VMEM budget.
    tm = max(ROW_ALIGN, min(tm, _round_up(M, ROW_ALIGN)))
    cap = _vmem_capacity_bytes()
    budget = int(cap * 0.75)
    while tm > ROW_ALIGN and _estimate_vmem(tm, th, Dp, nH, out_itemsize) > budget:
        tm = _round_up(tm // 2, ROW_ALIGN)
    Mp = _round_up(M, tm)
    # TODO(synk): on v7x (2 TensorCores) prefer an even Mp//tm so the "parallel"
    # row axis load-balances across cores.

    vmem_limit = min(cap, _estimate_vmem(tm, th, Dp, nH, out_itemsize) + (8 << 20))

    # Activations: cast to compute dtype; pad/copy only when actually required.
    x2 = x.reshape(M, D).astype(compute_dtype)
    if (Mp, Dp) != (M, D):
        # TODO(synk): for prod shapes (D % 128 == 0) use grid=pl.cdiv(M, tm) with a
        # masked last row tile instead of materializing a padded copy of x.
        x2 = jnp.zeros((Mp, Dp), compute_dtype).at[:M, :D].set(x2)

    flops = 6 * Mp * Dp * Hp                 # 2*M*D*2H + 2*M*H*D (padded, advisory)
    bytes_accessed = int(x2.size * 2 + wgu.size * 2 + wd.size * 2
                         + Mp * Dp * out_itemsize)

    def _call(w_kw):
        return pl.pallas_call(
            functools.partial(reglu_kernel, th=th),
            out_shape=jax.ShapeDtypeStruct((Mp, Dp), out_dtype),
            grid_spec=pltpu.PrefetchScalarGridSpec(
                num_scalar_prefetch=0,
                grid=(Mp // tm, nH),                 # rows parallel, H reduction last
                in_specs=[
                    pl.BlockSpec((tm, Dp), lambda i, h: (i, 0)),
                    pl.BlockSpec((Dp, 2 * th), lambda i, h: (0, h), **w_kw),
                    pl.BlockSpec((th, Dp), lambda i, h: (h, 0), **w_kw),
                ],
                out_specs=pl.BlockSpec((tm, Dp), lambda i, h: (i, 0)),
                scratch_shapes=[pltpu.VMEM((tm, Dp), jnp.float32)],
            ),
            compiler_params=pltpu.CompilerParams(
                dimension_semantics=("parallel", "arbitrary"),
                vmem_limit_bytes=int(vmem_limit)),
            cost_estimate=pl.CostEstimate(
                flops=flops, transcendentals=0, bytes_accessed=bytes_accessed),
        )(x2, wgu, wd)

    if nH == 1:
        # Constant-index weight blocks gain nothing from double buffering:
        # single-buffer them (halves weight VMEM).  Fall back gracefully if this
        # jax version does not support pipeline_mode on pallas_call BlockSpecs.
        try:
            out = _call({"pipeline_mode": pl.Buffered(1)})
        except Exception:
            out = _call({})
    else:
        out = _call({})

    if (Mp, Dp) != (M, D):
        out = out[:M, :D]
    return out.reshape(orig_shape)


def reglu(x, w1, w3, w2, *, tm=512, out_dtype=None, compute_dtype=jnp.bfloat16):
    """Convenience wrapper (packs weights every call; prefer pre-packing)."""
    wgu, wd, th = pack_reglu_weights(w1, w3, w2, compute_dtype=compute_dtype)
    return reglu_packed(x, wgu, wd, dim=x.shape[-1], hidden_dim=w1.shape[0],
                        th=th, tm=tm, out_dtype=out_dtype, compute_dtype=compute_dtype)


def reglu_reference(x, w1, w3, w2, compute_dtype=jnp.bfloat16):
    """Pure-JAX reference mirroring the kernel's bf16-operand / f32-accum math."""
    xc = x.astype(compute_dtype)
    g = jnp.dot(xc, w1.T.astype(compute_dtype), preferred_element_type=jnp.float32)
    u = jnp.dot(xc, w3.T.astype(compute_dtype), preferred_element_type=jnp.float32)
    h = (jnp.maximum(g, 0.0) * u).astype(compute_dtype)
    out = jnp.dot(h, w2.T.astype(compute_dtype), preferred_element_type=jnp.float32)
    return out.astype(x.dtype)


if __name__ == "__main__":
    # Module config: dim=32, hidden_dim=None -> 4*32=128 -> int(2*128/3)=85 ->
    # round up to multiple_of=4 -> 88.  bias=False, dropout=None (identity).
    dim = 32
    hidden_dim = 4 * dim
    hidden_dim = int(2 * hidden_dim / 3)
    multiple_of = 4
    hidden_dim = multiple_of * ((hidden_dim + multiple_of - 1) // multiple_of)  # 88

    batch, seq = 2, 8

    key = jax.random.PRNGKey(0)
    kx, k1, k3, k2 = jax.random.split(key, 4)

    # nn.Linear weight layout: (out_features, in_features).
    x = jax.random.normal(kx, (batch, seq, dim), dtype=jnp.float32)
    w1 = jax.random.normal(k1, (hidden_dim, dim), dtype=jnp.float32) * 0.05  # gate
    w3 = jax.random.normal(k3, (hidden_dim, dim), dtype=jnp.float32) * 0.05  # up
    w2 = jax.random.normal(k2, (dim, hidden_dim), dtype=jnp.float32) * 0.05  # down

    # Pack weights ONCE (hoisted out of the hot path), then run the kernel.
    wgu, wd, th = pack_reglu_weights(w1, w3, w2)
    out = reglu_packed(x, wgu, wd, dim=dim, hidden_dim=hidden_dim, th=th)
    out = jax.block_until_ready(out)

    ref = reglu_reference(x, w1, w3, w2)
    assert out.shape == (batch, seq, dim)
    assert jnp.allclose(out, ref, atol=1e-3, rtol=1e-3), "mismatch vs reference"

    print("KERNEL_OK")
</pallas_src>

<mosaic_0001>
module attributes {stable_mosaic.version = 11 : i64} {
  func.func @reglu_kernel(%arg0: i32, %arg1: i32, %arg2: memref<16x128xbf16, #tpu.memory_space<vmem>>, %arg3: memref<128x256xbf16, #tpu.memory_space<vmem>>, %arg4: memref<128x128xbf16, #tpu.memory_space<vmem>>, %arg5: memref<16x128xf32, #tpu.memory_space<vmem>>, %arg6: memref<16x128xf32, #tpu.memory_space<vmem>>) attributes {dimension_semantics = [#tpu.dimension_semantics<parallel>, #tpu.dimension_semantics<arbitrary>], iteration_bounds = array<i64: 1, 1>, scalar_prefetch = 0 : i64, scratch_operands = 1 : i64, tpu.core_type = #tpu.core_type<tc>, window_params = [{transform_indices = @transform_0, window_bounds = array<i64: 16, 128>}, {pipeline_mode = #tpu.pipeline_mode<synchronous>, transform_indices = @transform_1, window_bounds = array<i64: 128, 256>}, {pipeline_mode = #tpu.pipeline_mode<synchronous>, transform_indices = @transform_2, window_bounds = array<i64: 128, 128>}, {transform_indices = @transform_3, window_bounds = array<i64: 16, 128>}]} {
    %c0_i32 = arith.constant 0 : i32
    %0 = arith.cmpi eq, %arg1, %c0_i32 : i32
    %1 = arith.extui %0 : i1 to i32
    %c0_i32_0 = arith.constant 0 : i32
    %2 = arith.cmpi ne, %1, %c0_i32_0 : i32
    scf.if %2 {
      %cst_14 = arith.constant 0.000000e+00 : f32
      %20 = vector.broadcast %cst_14 : f32 to vector<16x128xf32>
      %c0_15 = arith.constant 0 : index
      %c0_16 = arith.constant 0 : index
      %21 = vector.load %arg6[%c0_15, %c0_16] : memref<16x128xf32, #tpu.memory_space<vmem>>, vector<16x128xf32>
      tpu.vector_store %arg6[%c0_15, %c0_16], %20 {strides = array<i32>} : memref<16x128xf32, #tpu.memory_space<vmem>>, vector<16x128xf32>,
    } else {
    }
    %c0 = arith.constant 0 : index
    %c0_1 = arith.constant 0 : index
    %3 = vector.load %arg2[%c0, %c0_1] : memref<16x128xbf16, #tpu.memory_space<vmem>>, vector<16x128xbf16>
    %c0_2 = arith.constant 0 : index
    %c0_3 = arith.constant 0 : index
    %4 = vector.load %arg3[%c0_2, %c0_3] : memref<128x256xbf16, #tpu.memory_space<vmem>>, vector<128x256xbf16>
    %cst = arith.constant dense<0.000000e+00> : vector<16x256xf32>
    %5 = tpu.matmul %3, %4, %cst {dimension_numbers = #tpu.dot_dimension_numbers<[1], [0], [0], [1], [0, 0, 1, 1], [], []>} : vector<16x128xbf16>, vector<128x256xbf16>, vector<16x256xf32> -> vector<16x256xf32>
    %6 = vector.extract_strided_slice %5 {offsets = [0, 0], sizes = [16, 128], strides = [1, 1]} : vector<16x256xf32> to vector<16x128xf32>
    %cst_4 = arith.constant 0.000000e+00 : f32
    %7 = vector.broadcast %cst_4 : f32 to vector<16x128xf32>
    %8 = arith.maximumf %6, %7 : vector<16x128xf32>
    %9 = vector.extract_strided_slice %5 {offsets = [0, 128], sizes = [16, 128], strides = [1, 1]} : vector<16x256xf32> to vector<16x128xf32>
    %10 = arith.mulf %8, %9 : vector<16x128xf32>
    %c0_5 = arith.constant 0 : index
    %c0_6 = arith.constant 0 : index
    %11 = vector.load %arg6[%c0_5, %c0_6] : memref<16x128xf32, #tpu.memory_space<vmem>>, vector<16x128xf32>
    %12 = arith.truncf %10 : vector<16x128xf32> to vector<16x128xbf16>
    %c0_7 = arith.constant 0 : index
    %c0_8 = arith.constant 0 : index
    %13 = vector.load %arg4[%c0_7, %c0_8] : memref<128x128xbf16, #tpu.memory_space<vmem>>, vector<128x128xbf16>
    %cst_9 = arith.constant dense<0.000000e+00> : vector<16x128xf32>
    %14 = tpu.matmul %12, %13, %cst_9 {dimension_numbers = #tpu.dot_dimension_numbers<[1], [0], [0], [1], [0, 0, 1, 1], [], []>} : vector<16x128xbf16>, vector<128x128xbf16>, vector<16x128xf32> -> vector<16x128xf32>
    %15 = arith.addf %11, %14 : vector<16x128xf32>
    %c0_10 = arith.constant 0 : index
    %c0_11 = arith.constant 0 : index
    %16 = vector.load %arg6[%c0_10, %c0_11] : memref<16x128xf32, #tpu.memory_space<vmem>>, vector<16x128xf32>
    tpu.vector_store %arg6[%c0_10, %c0_11], %15 {strides = array<i32>} : memref<16x128xf32, #tpu.memory_space<vmem>>, vector<16x128xf32>,
    %c0_i32_12 = arith.constant 0 : i32
    %17 = arith.cmpi eq, %arg1, %c0_i32_12 : i32
    %18 = arith.extui %17 : i1 to i32
    %c0_i32_13 = arith.constant 0 : i32
    %19 = arith.cmpi ne, %18, %c0_i32_13 : i32
    scf.if %19 {
      %c0_14 = arith.constant 0 : index
      %c0_15 = arith.constant 0 : index
      %20 = vector.load %arg6[%c0_14, %c0_15] : memref<16x128xf32, #tpu.memory_space<vmem>>, vector<16x128xf32>
      %c0_16 = arith.constant 0 : index
      %c0_17 = arith.constant 0 : index
      %21 = vector.load %arg5[%c0_16, %c0_17] : memref<16x128xf32, #tpu.memory_space<vmem>>, vector<16x128xf32>
      tpu.vector_store %arg5[%c0_16, %c0_17], %20 {strides = array<i32>} : memref<16x128xf32, #tpu.memory_space<vmem>>, vector<16x128xf32>,
    } else {
    }
    return
  }
  func.func @transform_0(%arg0: i32, %arg1: i32) -> (i32, i32) {
    %c0_i32 = arith.constant 0 : i32
    %c0_i32_0 = arith.constant 0 : i32
    return %arg0, %c0_i32 : i32, i32
  }
  func.func @transform_1(%arg0: i32, %arg1: i32) -> (i32, i32) {
    %c0_i32 = arith.constant 0 : i32
    %c0_i32_0 = arith.constant 0 : i32
    return %c0_i32, %arg1 : i32, i32
  }
  func.func @transform_2(%arg0: i32, %arg1: i32) -> (i32, i32) {
    %c0_i32 = arith.constant 0 : i32
    %c0_i32_0 = arith.constant 0 : i32
    return %arg1, %c0_i32 : i32, i32
  }
  func.func @transform_3(%arg0: i32, %arg1: i32) -> (i32, i32) {
    %c0_i32 = arith.constant 0 : i32
    %c0_i32_0 = arith.constant 0 : i32
    return %arg0, %c0_i32 : i32, i32
  }
}

module attributes {stable_mosaic.version = 11 : i64} {
  func.func @reglu_kernel(%arg0: i32, %arg1: i32, %arg2: memref<16x128xbf16, #tpu.memory_space<vmem>>, %arg3: memref<128x256xbf16, #tpu.memory_space<vmem>>, %arg4: memref<128x128xbf16, #tpu.memory_space<vmem>>, %arg5: memref<16x128xf32, #tpu.memory_space<vmem>>, %arg6: memref<16x128xf32, #tpu.memory_space<vmem>>) attributes {dimension_semantics = [#tpu.dimension_semantics<parallel>, #tpu.dimension_semantics<arbitrary>], iteration_bounds = array<i64: 1, 1>, scalar_prefetch = 0 : i64, scratch_operands = 1 : i64, tpu.core_type = #tpu.core_type<tc>, window_params = [{transform_indices = @transform_0, window_bounds = array<i64: 16, 128>}, {transform_indices = @transform_1, window_bounds = array<i64: 128, 256>}, {transform_indices = @transform_2, window_bounds = array<i64: 128, 128>}, {transform_indices = @transform_3, window_bounds = array<i64: 16, 128>}]} {
    %c0_i32 = arith.constant 0 : i32
    %0 = arith.cmpi eq, %arg1, %c0_i32 : i32
    %1 = arith.extui %0 : i1 to i32
    %c0_i32_0 = arith.constant 0 : i32
    %2 = arith.cmpi ne, %1, %c0_i32_0 : i32
    scf.if %2 {
      %cst_14 = arith.constant 0.000000e+00 : f32
      %20 = vector.broadcast %cst_14 : f32 to vector<16x128xf32>
      %c0_15 = arith.constant 0 : index
      %c0_16 = arith.constant 0 : index
      %21 = vector.load %arg6[%c0_15, %c0_16] : memref<16x128xf32, #tpu.memory_space<vmem>>, vector<16x128xf32>
      tpu.vector_store %arg6[%c0_15, %c0_16], %20 {strides = array<i32>} : memref<16x128xf32, #tpu.memory_space<vmem>>, vector<16x128xf32>,
    } else {
    }
    %c0 = arith.constant 0 : index
    %c0_1 = arith.constant 0 : index
    %3 = vector.load %arg2[%c0, %c0_1] : memref<16x128xbf16, #tpu.memory_space<vmem>>, vector<16x128xbf16>
    %c0_2 = arith.constant 0 : index
    %c0_3 = arith.constant 0 : index
    %4 = vector.load %arg3[%c0_2, %c0_3] : memref<128x256xbf16, #tpu.memory_space<vmem>>, vector<128x256xbf16>
    %cst = arith.constant dense<0.000000e+00> : vector<16x256xf32>
    %5 = tpu.matmul %3, %4, %cst {dimension_numbers = #tpu.dot_dimension_numbers<[1], [0], [0], [1], [0, 0, 1, 1], [], []>} : vector<16x128xbf16>, vector<128x256xbf16>, vector<16x256xf32> -> vector<16x256xf32>
    %6 = vector.extract_strided_slice %5 {offsets = [0, 0], sizes = [16, 128], strides = [1, 1]} : vector<16x256xf32> to vector<16x128xf32>
    %cst_4 = arith.constant 0.000000e+00 : f32
    %7 = vector.broadcast %cst_4 : f32 to vector<16x128xf32>
    %8 = arith.maximumf %6, %7 : vector<16x128xf32>
    %9 = vector.extract_strided_slice %5 {offsets = [0, 128], sizes = [16, 128], strides = [1, 1]} : vector<16x256xf32> to vector<16x128xf32>
    %10 = arith.mulf %8, %9 : vector<16x128xf32>
    %c0_5 = arith.constant 0 : index
    %c0_6 = arith.constant 0 : index
    %11 = vector.load %arg6[%c0_5, %c0_6] : memref<16x128xf32, #tpu.memory_space<vmem>>, vector<16x128xf32>
    %12 = arith.truncf %10 : vector<16x128xf32> to vector<16x128xbf16>
    %c0_7 = arith.constant 0 : index
    %c0_8 = arith.constant 0 : index
    %13 = vector.load %arg4[%c0_7, %c0_8] : memref<128x128xbf16, #tpu.memory_space<vmem>>, vector<128x128xbf16>
    %cst_9 = arith.constant dense<0.000000e+00> : vector<16x128xf32>
    %14 = tpu.matmul %12, %13, %cst_9 {dimension_numbers = #tpu.dot_dimension_numbers<[1], [0], [0], [1], [0, 0, 1, 1], [], []>} : vector<16x128xbf16>, vector<128x128xbf16>, vector<16x128xf32> -> vector<16x128xf32>
    %15 = arith.addf %11, %14 : vector<16x128xf32>
    %c0_10 = arith.constant 0 : index
    %c0_11 = arith.constant 0 : index
    %16 = vector.load %arg6[%c0_10, %c0_11] : memref<16x128xf32, #tpu.memory_space<vmem>>, vector<16x128xf32>
    tpu.vector_store %arg6[%c0_10, %c0_11], %15 {strides = array<i32>} : memref<16x128xf32, #tpu.memory_space<vmem>>, vector<16x128xf32>,
    %c0_i32_12 = arith.constant 0 : i32
    %17 = arith.cmpi eq, %arg1, %c0_i32_12 : i32
    %18 = arith.extui %17 : i1 to i32
    %c0_i32_13 = arith.constant 0 : i32
    %19 = arith.cmpi ne, %18, %c0_i32_13 : i32
    scf.if %19 {
      %c0_14 = arith.constant 0 : index
      %c0_15 = arith.constant 0 : index
      %20 = vector.load %arg6[%c0_14, %c0_15] : memref<16x128xf32, #tpu.memory_space<vmem>>, vector<16x128xf32>
      %c0_16 = arith.constant 0 : index
      %c0_17 = arith.constant 0 : index
      %21 = vector.load %arg5[%c0_16, %c0_17] : memref<16x128xf32, #tpu.memory_space<vmem>>, vector<16x128xf32>
      tpu.vector_store %arg5[%c0_16, %c0_17], %20 {strides = array<i32>} : memref<16x128xf32, #tpu.memory_space<vmem>>, vector<16x128xf32>,
    } else {
    }
    return
  }
  func.func @transform_0(%arg0: i32, %arg1: i32) -> (i32, i32) {
    %c0_i32 = arith.constant 0 : i32
    %c0_i32_0 = arith.constant 0 : i32
    return %arg0, %c0_i32 : i32, i32
  }
  func.func @transform_1(%arg0: i32, %arg1: i32) -> (i32, i32) {
    %c0_i32 = arith.constant 0 : i32
    %c0_i32_0 = arith.constant 0 : i32
    return %c0_i32, %arg1 : i32, i32
  }
  func.func @transform_2(%arg0: i32, %arg1: i32) -> (i32, i32) {
    %c0_i32 = arith.constant 0 : i32
    %c0_i32_0 = arith.constant 0 : i32
    return %arg1, %c0_i32 : i32, i32
  }
  func.func @transform_3(%arg0: i32, %arg1: i32) -> (i32, i32) {
    %c0_i32 = arith.constant 0 : i32
    %c0_i32_0 = arith.constant 0 : i32
    return %arg0, %c0_i32 : i32, i32
  }
}

</mosaic_0001>

<llo_original>
// kernel: tpu_custom_call.1
$region0: #{tpu_custom_call.1}
  #allocation0 [shape = 'u32[]', space=smem, size = 0x4, offset = 0x4, fixed_abs, tag = 'smem constant byte address 0x4 - core index']
  #allocation1 [shape = 'u32[144,128]{1,0:T(1,128)}', space=vmem, size = 0x12000, scoped, tag = 'internal scratch']
  #allocation2 [shape = 'f32[16,128]{1,0:T(8,128)}', space=vmem, size = 0x2000, scoped, tag = 'scratch operand']
  %s0 = inlined_call_operand.hbm [shape: bf16[16,128], index: 0, kind: input, shape index: {}]
  %s1 = inlined_call_operand.hbm [shape: bf16[128,256], index: 1, kind: input, shape index: {}]
  %s2 = inlined_call_operand.hbm [shape: bf16[128,128], index: 2, kind: input, shape index: {}]
  %s3 = inlined_call_operand.hbm [shape: f32[16,128], index: 3, kind: output, shape index: {}]
  %s4 = sld [smem:[#allocation0]]
  $region42: #{tpu_custom_call.1} parent=0
    _
  %s6 = ssub.s32 1, %s4
  %s7 = scalar_select 0, %s6, %s4
  $region1: #{tpu_custom_call.1} parent=0
    #allocation3 [shape = 'u8[4096]{0}', space=vmem, size = 0x1000, scoped, tag = 'input window, operand 0, single buffered']
    #allocation4 [shape = 's32[1]{0}', space=sflag, size = 0x4, scoped, tag = 'scoped memory for tpu_custom_call.1']
    #allocation5 [shape = 's32[1]{0}', space=sflag, size = 0x4, scoped, tag = 'scoped memory for tpu_custom_call.1']
    #allocation6 [shape = 'u8[65536]{0}', space=vmem, size = 0x10000, scoped, tag = 'input window, operand 1, single buffered']
    #allocation7 [shape = 's32[1]{0}', space=sflag, size = 0x4, scoped, tag = 'scoped memory for tpu_custom_call.1']
    #allocation8 [shape = 'u8[32768]{0}', space=vmem, size = 0x8000, scoped, tag = 'input window, operand 2, single buffered']
    #allocation9 [shape = 'u8[8192]{0}', space=vmem, size = 0x2000, scoped, tag = 'output window, operand 0, single buffered']
    %8 = vsyncpa [#allocation4], 0
    %9 = vsyncpa [#allocation7], 0
    %10 = vsyncpa [#allocation5], 0
    // Predicated region
    $region2: #{tpu_custom_call.1} parent=1 // pred_check
      _
    $region3: #{tpu_custom_call.1} parent=1 // pred_check_branch
      %12 = sbr.rel (0) target = $region5
    $region4: #{tpu_custom_call.1} parent=1 // pred_region
      %s14 = ssub.s32 128, 128
      %15 = vsyncadd [#allocation4], %s14
      %s16 = sshll.u32 [#allocation3], 4
      %s17 = int_to_ptr.vmem [resolvable:$true] %s16
      %22 = dma.hbm_to_vmem [thread:$0]  %s0, 128, %s17, [#allocation4], 64, 64, 4
    $region5: #{tpu_custom_call.1} parent=1 // pred_fallthru
      _
    // Predicated region
    $region6: #{tpu_custom_call.1} parent=1 // pred_check
      _
    $region7: #{tpu_custom_call.1} parent=1 // pred_check_branch
      %24 = sbr.rel (0) target = $region9
    $region8: #{tpu_custom_call.1} parent=1 // pred_region
      %s26 = ssub.s32 2048, 2048
      %27 = vsyncadd [#allocation7], %s26
      %s28 = sshll.u32 [#allocation6], 4
      %s29 = int_to_ptr.vmem [resolvable:$true] %s28
      %34 = dma.hbm_to_vmem [thread:$0]  %s1, 2048, %s29, [#allocation7], 128, 128, 8
    $region9: #{tpu_custom_call.1} parent=1 // pred_fallthru
      _
    // Predicated region
    $region10: #{tpu_custom_call.1} parent=1 // pred_check
      _
    $region11: #{tpu_custom_call.1} parent=1 // pred_check_branch
      %36 = sbr.rel (0) target = $region13
    $region12: #{tpu_custom_call.1} parent=1 // pred_region
      %s38 = ssub.s32 1024, 1024
      %39 = vsyncadd [#allocation7], %s38
      %s40 = sshll.u32 [#allocation8], 4
      %s41 = int_to_ptr.vmem [resolvable:$true] %s40
      %46 = dma.hbm_to_vmem [thread:$0]  %s2, 1024, %s41, [#allocation7], 64, 64, 4
    $region13: #{tpu_custom_call.1} parent=1 // pred_fallthru
      _
    // Predicated region
    $region14: #{tpu_custom_call.1} parent=1 // pred_check
      _
    $region15: #{tpu_custom_call.1} parent=1 // pred_check_branch
      %48 = sbr.rel (0) target = $region17
    $region16: #{tpu_custom_call.1} parent=1 // pred_region
      %49 = dma.done [#allocation4], 128
    $region17: #{tpu_custom_call.1} parent=1 // pred_fallthru
      _
    // Predicated region
    $region18: #{tpu_custom_call.1} parent=1 // pred_check
      _
    $region19: #{tpu_custom_call.1} parent=1 // pred_check_branch
      %51 = sbr.rel (0) target = $region21
    $region20: #{tpu_custom_call.1} parent=1 // pred_region
      %52 = dma.done [#allocation7], 2048
    $region21: #{tpu_custom_call.1} parent=1 // pred_fallthru
      _
    // Predicated region
    $region22: #{tpu_custom_call.1} parent=1 // pred_check
      _
    $region23: #{tpu_custom_call.1} parent=1 // pred_check_branch
      %54 = sbr.rel (0) target = $region25
    $region24: #{tpu_custom_call.1} parent=1 // pred_region
      %55 = dma.done [#allocation7], 1024
    $region25: #{tpu_custom_call.1} parent=1 // pred_fallthru
      _
    %p57 = scmp.eq.s32.totalorder 0, 0
    // Predicated region
    $region26: #{tpu_custom_call.1} parent=1 // pred_check
      %p58 = pneg %p57
    $region27: #{tpu_custom_call.1} parent=1 // pred_check_branch
      %60 = sbr.rel (%p58) target = $region29
    $region28: #{tpu_custom_call.1} parent=1 // pred_region
      %61 = vst [vmem:[#allocation2] sm:$0xff] 0.0
      %62 = vst [vmem:[#allocation2 + $0x8] sm:$0xff] 0.0
    $region29: #{tpu_custom_call.1} parent=1 // pred_fallthru
      _
    %v63 = vld [vmem:[#allocation3] sm:$0xf]
    %v64 = vld [vmem:[#allocation3 + $0x4] sm:$0xf]
    %v65 = vld [vmem:[#allocation6] sm:$0xff]
    %v66 = vld [vmem:[#allocation6 + $0x8] sm:$0xff]
    %v67 = vld [vmem:[#allocation6 + $0x10] sm:$0xff]
    %v68 = vld [vmem:[#allocation6 + $0x18] sm:$0xff]
    %v69 = vld [vmem:[#allocation6 + $0x20] sm:$0xff]
    %v70 = vld [vmem:[#allocation6 + $0x28] sm:$0xff]
    %v71 = vld [vmem:[#allocation6 + $0x30] sm:$0xff]
    %v72 = vld [vmem:[#allocation6 + $0x38] sm:$0xff]
    %v73 = vld [vmem:[#allocation6 + $0x40] sm:$0xff]
    %v74 = vld [vmem:[#allocation6 + $0x48] sm:$0xff]
    %v75 = vld [vmem:[#allocation6 + $0x50] sm:$0xff]
    %v76 = vld [vmem:[#allocation6 + $0x58] sm:$0xff]
    %v77 = vld [vmem:[#allocation6 + $0x60] sm:$0xff]
    %v78 = vld [vmem:[#allocation6 + $0x68] sm:$0xff]
    %v79 = vld [vmem:[#allocation6 + $0x70] sm:$0xff]
    %v80 = vld [vmem:[#allocation6 + $0x78] sm:$0xff]
    %v83 = vunpack.c.l.b16 %v63
    %v84 = vunpack.c.l.b16 %v64
    %v85 = vpack.c.b16 %v84, %v83
    %v103 = vunpack.c.l.b16 %v65
    %v104 = vunpack.c.h.b16 %v65
    %v105 = vunpack.c.l.b16 %v66
    %v106 = vunpack.c.h.b16 %v66
    %v107 = vunpack.c.l.b16 %v67
    %v108 = vunpack.c.h.b16 %v67
    %v109 = vunpack.c.l.b16 %v68
    %v110 = vunpack.c.h.b16 %v68
    %v111 = vunpack.c.l.b16 %v69
    %v112 = vunpack.c.h.b16 %v69
    %v113 = vunpack.c.l.b16 %v70
    %v114 = vunpack.c.h.b16 %v70
    %v115 = vunpack.c.l.b16 %v71
    %v116 = vunpack.c.h.b16 %v71
    %v117 = vunpack.c.l.b16 %v72
    %v118 = vunpack.c.h.b16 %v72
    %v119 = vunpack.c.l.b16 %v73
    %v120 = vunpack.c.h.b16 %v73
    %v121 = vunpack.c.l.b16 %v74
    %v122 = vunpack.c.h.b16 %v74
    %v123 = vunpack.c.l.b16 %v75
    %v124 = vunpack.c.h.b16 %v75
    %v125 = vunpack.c.l.b16 %v76
    %v126 = vunpack.c.h.b16 %v76
    %v127 = vunpack.c.l.b16 %v77
    %v128 = vunpack.c.h.b16 %v77
    %v129 = vunpack.c.l.b16 %v78
    %v130 = vunpack.c.h.b16 %v78
    %v131 = vunpack.c.l.b16 %v79
    %v132 = vunpack.c.h.b16 %v79
    %v133 = vunpack.c.l.b16 %v80
    %v134 = vunpack.c.h.b16 %v80
    %v135 = vpack.c.b16 %v105, %v103
    %v136 = vpack.c.b16 %v106, %v104
    %v137 = vpack.c.b16 %v109, %v107
    %v138 = vpack.c.b16 %v110, %v108
    %v139 = vpack.c.b16 %v113, %v111
    %v140 = vpack.c.b16 %v114, %v112
    %v141 = vpack.c.b16 %v117, %v115
    %v142 = vpack.c.b16 %v118, %v116
    %v143 = vpack.c.b16 %v121, %v119
    %v144 = vpack.c.b16 %v122, %v120
    %v145 = vpack.c.b16 %v125, %v123
    %v146 = vpack.c.b16 %v126, %v124
    %v147 = vpack.c.b16 %v129, %v127
    %v148 = vpack.c.b16 %v130, %v128
    %v149 = vpack.c.b16 %v133, %v131
    %v150 = vpack.c.b16 %v134, %v132
    %167 = vmatprep.subr.bf16.mxu0 %v150
    %168 = vmatpush1.bf16.msra.mxu0 %v149
    %169 = vmatprep.subr.bf16.mxu0 %v148
    %170 = vmatpush1.bf16.msra.mxu0 %v147
    %171 = vmatprep.subr.bf16.mxu0 %v146
    %172 = vmatpush1.bf16.msra.mxu0 %v145
    %173 = vmatprep.subr.bf16.mxu0 %v144
    %174 = vmatpush1.bf16.msra.mxu0 %v143
    %175 = vmatprep.subr.bf16.mxu0 %v142
    %176 = vmatpush1.bf16.msra.mxu0 %v141
    %177 = vmatprep.subr.bf16.mxu0 %v140
    %178 = vmatpush1.bf16.msra.mxu0 %v139
    %179 = vmatprep.subr.bf16.mxu0 %v138
    %180 = vmatpush1.bf16.msra.mxu0 %v137
    %181 = vmatprep.subr.bf16.mxu0 %v136
    %182 = vmatpush1.bf16.msra.mxu0 %v135
    %183 = vmatprep.subr.bf16.mxu0 0
    %184 = vmatpush2.bf16.msra.mxu0 0
    %185 = vmatprep.subr.bf16.mxu0 0
    %186 = vmatpush2.bf16.msra.mxu0 0
    %187 = vmatprep.subr.bf16.mxu0 0
    %188 = vmatpush2.bf16.msra.mxu0 0
    %189 = vmatprep.subr.bf16.mxu0 0
    %190 = vmatpush2.bf16.msra.mxu0 0
    %191 = vmatprep.subr.bf16.mxu0 0
    %192 = vmatpush2.bf16.msra.mxu0 0
    %193 = vmatprep.subr.bf16.mxu0 0
    %194 = vmatpush2.bf16.msra.mxu0 0
    %195 = vmatprep.subr.bf16.mxu0 0
    %196 = vmatpush2.bf16.msra.mxu0 0
    %197 = vmatprep.subr.bf16.mxu0 0
    %198 = vmatpush2.bf16.msra.mxu0 0
    %199 = vmatprep.mubr.bf16.mxu0 0
    %200 = vmatmul.mubr.bf16.gmra.mxu0 %v85
    %v201 = vpop.f32.mrf.mxu0
    %v202 = vadd.f32 0.0, %v201
    %v203 = vpop.f32.mrf.mxu0
    %v204 = vadd.f32 0.0, %v203
    %v205 = vpop.f32.mrf.mxu0
    %v206 = vadd.f32 0.0, %v205
    %v207 = vpop.f32.mrf.mxu0
    %v208 = vadd.f32 0.0, %v207
    %209 = vdwg.mxu0
    %v210 = vmax.f32 %v202, 0.0
    %v211 = vmax.f32 %v206, 0.0
    %v212 = vmul.f32 %v210, %v204
    %v213 = vmul.f32 %v211, %v208
    %v214 = vld [vmem:[#allocation2] sm:$0xff]
    %v215 = vld [vmem:[#allocation2 + $0x8] sm:$0xff]
    %v216 = vpack.c.bf16 %v213, %v212
    %v217 = vld [vmem:[#allocation8] sm:$0xf]
    %v218 = vld [vmem:[#allocation8 + $0x4] sm:$0xf]
    %v219 = vld [vmem:[#allocation8 + $0x8] sm:$0xf]
    %v220 = vld [vmem:[#allocation8 + $0xc] sm:$0xf]
    %v221 = vld [vmem:[#allocation8 + $0x10] sm:$0xf]
    %v222 = vld [vmem:[#allocation8 + $0x14] sm:$0xf]
    %v223 = vld [vmem:[#allocation8 + $0x18] sm:$0xf]
    %v224 = vld [vmem:[#allocation8 + $0x1c] sm:$0xf]
    %v225 = vld [vmem:[#allocation8 + $0x20] sm:$0xf]
    %v226 = vld [vmem:[#allocation8 + $0x24] sm:$0xf]
    %v227 = vld [vmem:[#allocation8 + $0x28] sm:$0xf]
    %v228 = vld [vmem:[#allocation8 + $0x2c] sm:$0xf]
    %v229 = vld [vmem:[#allocation8 + $0x30] sm:$0xf]
    %v230 = vld [vmem:[#allocation8 + $0x34] sm:$0xf]
    %v231 = vld [vmem:[#allocation8 + $0x38] sm:$0xf]
    %v232 = vld [vmem:[#allocation8 + $0x3c] sm:$0xf]
    %v249 = vunpack.c.l.b16 %v217
    %v250 = vunpack.c.l.b16 %v218
    %v251 = vunpack.c.l.b16 %v219
    %v252 = vunpack.c.l.b16 %v220
    %v253 = vunpack.c.l.b16 %v221
    %v254 = vunpack.c.l.b16 %v222
    %v255 = vunpack.c.l.b16 %v223
    %v256 = vunpack.c.l.b16 %v224
    %v257 = vunpack.c.l.b16 %v225
    %v258 = vunpack.c.l.b16 %v226
    %v259 = vunpack.c.l.b16 %v227
    %v260 = vunpack.c.l.b16 %v228
    %v261 = vunpack.c.l.b16 %v229
    %v262 = vunpack.c.l.b16 %v230
    %v263 = vunpack.c.l.b16 %v231
    %v264 = vunpack.c.l.b16 %v232
    %v265 = vpack.c.b16 %v250, %v249
    %v266 = vpack.c.b16 %v252, %v251
    %v267 = vpack.c.b16 %v254, %v253
    %v268 = vpack.c.b16 %v256, %v255
    %v269 = vpack.c.b16 %v258, %v257
    %v270 = vpack.c.b16 %v260, %v259
    %v271 = vpack.c.b16 %v262, %v261
    %v272 = vpack.c.b16 %v264, %v263
    %281 = vmatprep.subr.bf16.mxu0 0
    %282 = vmatpush1.bf16.msra.mxu0 %v272
    %283 = vmatprep.subr.bf16.mxu0 0
    %284 = vmatpush1.bf16.msra.mxu0 %v271
    %285 = vmatprep.subr.bf16.mxu0 0
    %286 = vmatpush1.bf16.msra.mxu0 %v270
    %287 = vmatprep.subr.bf16.mxu0 0
    %288 = vmatpush1.bf16.msra.mxu0 %v269
    %289 = vmatprep.subr.bf16.mxu0 0
    %290 = vmatpush1.bf16.msra.mxu0 %v268
    %291 = vmatprep.subr.bf16.mxu0 0
    %292 = vmatpush1.bf16.msra.mxu0 %v267
    %293 = vmatprep.subr.bf16.mxu0 0
    %294 = vmatpush1.bf16.msra.mxu0 %v266
    %295 = vmatprep.subr.bf16.mxu0 0
    %296 = vmatpush1.bf16.msra.mxu0 %v265
    %297 = vmatprep.subr.bf16.mxu0 0
    %298 = vmatpush2.bf16.msra.mxu0 0
    %299 = vmatprep.subr.bf16.mxu0 0
    %300 = vmatpush2.bf16.msra.mxu0 0
    %301 = vmatprep.subr.bf16.mxu0 0
    %302 = vmatpush2.bf16.msra.mxu0 0
    %303 = vmatprep.subr.bf16.mxu0 0
    %304 = vmatpush2.bf16.msra.mxu0 0
    %305 = vmatprep.subr.bf16.mxu0 0
    %306 = vmatpush2.bf16.msra.mxu0 0
    %307 = vmatprep.subr.bf16.mxu0 0
    %308 = vmatpush2.bf16.msra.mxu0 0
    %309 = vmatprep.subr.bf16.mxu0 0
    %310 = vmatpush2.bf16.msra.mxu0 0
    %311 = vmatprep.subr.bf16.mxu0 0
    %312 = vmatpush2.bf16.msra.mxu0 0
    %313 = vmatprep.mubr.bf16.mxu0 0
    %314 = vmatmul.mubr.bf16.gmra.mxu0 %v216
    %v315 = vpop.f32.mrf.mxu0
    %v316 = vadd.f32 0.0, %v315
    %v317 = vpop.f32.mrf.mxu0
    %v318 = vpop.f32.mrf.mxu0
    %v319 = vadd.f32 0.0, %v318
    %v320 = vpop.f32.mrf.mxu0
    %321 = vdwg.mxu0
    %v322 = vadd.f32 %v214, %v316
    %v323 = vadd.f32 %v215, %v319
    %324 = vst [vmem:[#allocation2] sm:$0xff] %v322
    %325 = vst [vmem:[#allocation2 + $0x8] sm:$0xff] %v323
    // Predicated region
    $region30: #{tpu_custom_call.1} parent=1 // pred_check
      %p326 = pneg %p57
    $region31: #{tpu_custom_call.1} parent=1 // pred_check_branch
      %328 = sbr.rel (%p326) target = $region33
    $region32: #{tpu_custom_call.1} parent=1 // pred_region
      %v329 = vld [vmem:[#allocation2] sm:$0xff]
      %v330 = vld [vmem:[#allocation2 + $0x8] sm:$0xff]
      %331 = vst [vmem:[#allocation9] sm:$0xff] %v329
      %332 = vst [vmem:[#allocation9 + $0x8] sm:$0xff] %v330
    $region33: #{tpu_custom_call.1} parent=1 // pred_fallthru
      _
    // Predicated region
    $region34: #{tpu_custom_call.1} parent=1 // pred_check
      _
    $region35: #{tpu_custom_call.1} parent=1 // pred_check_branch
      %334 = sbr.rel (0) target = $region37
    $region36: #{tpu_custom_call.1} parent=1 // pred_region
      %s336 = ssub.s32 256, 256
      %337 = vsyncadd [#allocation5], %s336
      %s338 = sshll.u32 [#allocation9], 4
      %s339 = int_to_ptr.vmem [resolvable:$true] %s338
      %344 = dma.vmem_to_hbm [thread:$0]  %s339, 256, %s3, [#allocation5], 128, 128, 8
    $region37: #{tpu_custom_call.1} parent=1 // pred_fallthru
      _
    // Predicated region
    $region38: #{tpu_custom_call.1} parent=1 // pred_check
      _
    $region39: #{tpu_custom_call.1} parent=1 // pred_check_branch
      %346 = sbr.rel (0) target = $region41
    $region40: #{tpu_custom_call.1} parent=1 // pred_region
      %347 = dma.done [#allocation5], 256
    $region41: #{tpu_custom_call.1} parent=1 // pred_fallthru
      _
    %348 = vsyncpa [#allocation4], 1
    %349 = vsyncpa [#allocation7], 1
    %350 = vsyncpa [#allocation5], 1

// kernel: tpu_custom_call.1
$region0: #{tpu_custom_call.1}
  #allocation0 [shape = 'u32[]', space=smem, size = 0x4, offset = 0x4, fixed_abs, tag = 'smem constant byte address 0x4 - core index']
  #allocation1 [shape = 'u32[144,128]{1,0:T(1,128)}', space=vmem, size = 0x12000, scoped, tag = 'internal scratch']
  #allocation2 [shape = 'f32[16,128]{1,0:T(8,128)}', space=vmem, size = 0x2000, scoped, tag = 'scratch operand']
  %s0 = inlined_call_operand.hbm [shape: bf16[16,128], index: 0, kind: input, shape index: {}]
  %s1 = inlined_call_operand.hbm [shape: bf16[128,256], index: 1, kind: input, shape index: {}]
  %s2 = inlined_call_operand.hbm [shape: bf16[128,128], index: 2, kind: input, shape index: {}]
  %s3 = inlined_call_operand.hbm [shape: f32[16,128], index: 3, kind: output, shape index: {}]
  %s4 = sld [smem:[#allocation0]]
  $region42: #{tpu_custom_call.1} parent=0
    _
  %s6 = ssub.s32 1, %s4
  %s7 = scalar_select 0, %s6, %s4
  $region1: #{tpu_custom_call.1} parent=0
    #allocation3 [shape = 'u8[4096]{0}', space=vmem, size = 0x1000, scoped, tag = 'input window, operand 0, single buffered']
    #allocation4 [shape = 's32[1]{0}', space=sflag, size = 0x4, scoped, tag = 'scoped memory for tpu_custom_call.1']
    #allocation5 [shape = 's32[1]{0}', space=sflag, size = 0x4, scoped, tag = 'scoped memory for tpu_custom_call.1']
    #allocation6 [shape = 'u8[65536]{0}', space=vmem, size = 0x10000, scoped, tag = 'input window, operand 1, single buffered']
    #allocation7 [shape = 's32[1]{0}', space=sflag, size = 0x4, scoped, tag = 'scoped memory for tpu_custom_call.1']
    #allocation8 [shape = 'u8[32768]{0}', space=vmem, size = 0x8000, scoped, tag = 'input window, operand 2, single buffered']
    #allocation9 [shape = 'u8[8192]{0}', space=vmem, size = 0x2000, scoped, tag = 'output window, operand 0, single buffered']
    %8 = vsyncpa [#allocation4], 0
    %9 = vsyncpa [#allocation7], 0
    %10 = vsyncpa [#allocation5], 0
    // Predicated region
    $region2: #{tpu_custom_call.1} parent=1 // pred_check
      _
    $region3: #{tpu_custom_call.1} parent=1 // pred_check_branch
      %12 = sbr.rel (0) target = $region5
    $region4: #{tpu_custom_call.1} parent=1 // pred_region
      %s14 = ssub.s32 128, 128
      %15 = vsyncadd [#allocation4], %s14
      %s16 = sshll.u32 [#allocation3], 4
      %s17 = int_to_ptr.vmem [resolvable:$true] %s16
      %22 = dma.hbm_to_vmem [thread:$0]  %s0, 128, %s17, [#allocation4], 64, 64, 4
    $region5: #{tpu_custom_call.1} parent=1 // pred_fallthru
      _
    // Predicated region
    $region6: #{tpu_custom_call.1} parent=1 // pred_check
      _
    $region7: #{tpu_custom_call.1} parent=1 // pred_check_branch
      %24 = sbr.rel (0) target = $region9
    $region8: #{tpu_custom_call.1} parent=1 // pred_region
      %s26 = ssub.s32 2048, 2048
      %27 = vsyncadd [#allocation7], %s26
      %s28 = sshll.u32 [#allocation6], 4
      %s29 = int_to_ptr.vmem [resolvable:$true] %s28
      %34 = dma.hbm_to_vmem [thread:$0]  %s1, 2048, %s29, [#allocation7], 128, 128, 8
    $region9: #{tpu_custom_call.1} parent=1 // pred_fallthru
      _
    // Predicated region
    $region10: #{tpu_custom_call.1} parent=1 // pred_check
      _
    $region11: #{tpu_custom_call.1} parent=1 // pred_check_branch
      %36 = sbr.rel (0) target = $region13
    $region12: #{tpu_custom_call.1} parent=1 // pred_region
      %s38 = ssub.s32 1024, 1024
      %39 = vsyncadd [#allocation7], %s38
      %s40 = sshll.u32 [#allocation8], 4
      %s41 = int_to_ptr.vmem [resolvable:$true] %s40
      %46 = dma.hbm_to_vmem [thread:$0]  %s2, 1024, %s41, [#allocation7], 64, 64, 4
    $region13: #{tpu_custom_call.1} parent=1 // pred_fallthru
      _
    // Predicated region
    $region14: #{tpu_custom_call.1} parent=1 // pred_check
      _
    $region15: #{tpu_custom_call.1} parent=1 // pred_check_branch
      %48 = sbr.rel (0) target = $region17
    $region16: #{tpu_custom_call.1} parent=1 // pred_region
      %49 = dma.done [#allocation4], 128
    $region17: #{tpu_custom_call.1} parent=1 // pred_fallthru
      _
    // Predicated region
    $region18: #{tpu_custom_call.1} parent=1 // pred_check
      _
    $region19: #{tpu_custom_call.1} parent=1 // pred_check_branch
      %51 = sbr.rel (0) target = $region21
    $region20: #{tpu_custom_call.1} parent=1 // pred_region
      %52 = dma.done [#allocation7], 2048
    $region21: #{tpu_custom_call.1} parent=1 // pred_fallthru
      _
    // Predicated region
    $region22: #{tpu_custom_call.1} parent=1 // pred_check
      _
    $region23: #{tpu_custom_call.1} parent=1 // pred_check_branch
      %54 = sbr.rel (0) target = $region25
    $region24: #{tpu_custom_call.1} parent=1 // pred_region
      %55 = dma.done [#allocation7], 1024
    $region25: #{tpu_custom_call.1} parent=1 // pred_fallthru
      _
    %p57 = scmp.eq.s32.totalorder 0, 0
    // Predicated region
    $region26: #{tpu_custom_call.1} parent=1 // pred_check
      %p58 = pneg %p57
    $region27: #{tpu_custom_call.1} parent=1 // pred_check_branch
      %60 = sbr.rel (%p58) target = $region29
    $region28: #{tpu_custom_call.1} parent=1 // pred_region
      %61 = vst [vmem:[#allocation2] sm:$0xff] 0.0
      %62 = vst [vmem:[#allocation2 + $0x8] sm:$0xff] 0.0
    $region29: #{tpu_custom_call.1} parent=1 // pred_fallthru
      _
    %v63 = vld [vmem:[#allocation3] sm:$0xf]
    %v64 = vld [vmem:[#allocation3 + $0x4] sm:$0xf]
    %v65 = vld [vmem:[#allocation6] sm:$0xff]
    %v66 = vld [vmem:[#allocation6 + $0x8] sm:$0xff]
    %v67 = vld [vmem:[#allocation6 + $0x10] sm:$0xff]
    %v68 = vld [vmem:[#allocation6 + $0x18] sm:$0xff]
    %v69 = vld [vmem:[#allocation6 + $0x20] sm:$0xff]
    %v70 = vld [vmem:[#allocation6 + $0x28] sm:$0xff]
    %v71 = vld [vmem:[#allocation6 + $0x30] sm:$0xff]
    %v72 = vld [vmem:[#allocation6 + $0x38] sm:$0xff]
    %v73 = vld [vmem:[#allocation6 + $0x40] sm:$0xff]
    %v74 = vld [vmem:[#allocation6 + $0x48] sm:$0xff]
    %v75 = vld [vmem:[#allocation6 + $0x50] sm:$0xff]
    %v76 = vld [vmem:[#allocation6 + $0x58] sm:$0xff]
    %v77 = vld [vmem:[#allocation6 + $0x60] sm:$0xff]
    %v78 = vld [vmem:[#allocation6 + $0x68] sm:$0xff]
    %v79 = vld [vmem:[#allocation6 + $0x70] sm:$0xff]
    %v80 = vld [vmem:[#allocation6 + $0x78] sm:$0xff]
    %v83 = vunpack.c.l.b16 %v63
    %v84 = vunpack.c.l.b16 %v64
    %v85 = vpack.c.b16 %v84, %v83
    %v103 = vunpack.c.l.b16 %v65
    %v104 = vunpack.c.h.b16 %v65
    %v105 = vunpack.c.l.b16 %v66
    %v106 = vunpack.c.h.b16 %v66
    %v107 = vunpack.c.l.b16 %v67
    %v108 = vunpack.c.h.b16 %v67
    %v109 = vunpack.c.l.b16 %v68
    %v110 = vunpack.c.h.b16 %v68
    %v111 = vunpack.c.l.b16 %v69
    %v112 = vunpack.c.h.b16 %v69
    %v113 = vunpack.c.l.b16 %v70
    %v114 = vunpack.c.h.b16 %v70
    %v115 = vunpack.c.l.b16 %v71
    %v116 = vunpack.c.h.b16 %v71
    %v117 = vunpack.c.l.b16 %v72
    %v118 = vunpack.c.h.b16 %v72
    %v119 = vunpack.c.l.b16 %v73
    %v120 = vunpack.c.h.b16 %v73
    %v121 = vunpack.c.l.b16 %v74
    %v122 = vunpack.c.h.b16 %v74
    %v123 = vunpack.c.l.b16 %v75
    %v124 = vunpack.c.h.b16 %v75
    %v125 = vunpack.c.l.b16 %v76
    %v126 = vunpack.c.h.b16 %v76
    %v127 = vunpack.c.l.b16 %v77
    %v128 = vunpack.c.h.b16 %v77
    %v129 = vunpack.c.l.b16 %v78
    %v130 = vunpack.c.h.b16 %v78
    %v131 = vunpack.c.l.b16 %v79
    %v132 = vunpack.c.h.b16 %v79
    %v133 = vunpack.c.l.b16 %v80
    %v134 = vunpack.c.h.b16 %v80
    %v135 = vpack.c.b16 %v105, %v103
    %v136 = vpack.c.b16 %v106, %v104
    %v137 = vpack.c.b16 %v109, %v107
    %v138 = vpack.c.b16 %v110, %v108
    %v139 = vpack.c.b16 %v113, %v111
    %v140 = vpack.c.b16 %v114, %v112
    %v141 = vpack.c.b16 %v117, %v115
    %v142 = vpack.c.b16 %v118, %v116
    %v143 = vpack.c.b16 %v121, %v119
    %v144 = vpack.c.b16 %v122, %v120
    %v145 = vpack.c.b16 %v125, %v123
    %v146 = vpack.c.b16 %v126, %v124
    %v147 = vpack.c.b16 %v129, %v127
    %v148 = vpack.c.b16 %v130, %v128
    %v149 = vpack.c.b16 %v133, %v131
    %v150 = vpack.c.b16 %v134, %v132
    %167 = vmatprep.subr.bf16.mxu0 %v150
    %168 = vmatpush1.bf16.msra.mxu0 %v149
    %169 = vmatprep.subr.bf16.mxu0 %v148
    %170 = vmatpush1.bf16.msra.mxu0 %v147
    %171 = vmatprep.subr.bf16.mxu0 %v146
    %172 = vmatpush1.bf16.msra.mxu0 %v145
    %173 = vmatprep.subr.bf16.mxu0 %v144
    %174 = vmatpush1.bf16.msra.mxu0 %v143
    %175 = vmatprep.subr.bf16.mxu0 %v142
    %176 = vmatpush1.bf16.msra.mxu0 %v141
    %177 = vmatprep.subr.bf16.mxu0 %v140
    %178 = vmatpush1.bf16.msra.mxu0 %v139
    %179 = vmatprep.subr.bf16.mxu0 %v138
    %180 = vmatpush1.bf16.msra.mxu0 %v137
    %181 = vmatprep.subr.bf16.mxu0 %v136
    %182 = vmatpush1.bf16.msra.mxu0 %v135
    %183 = vmatprep.subr.bf16.mxu0 0
    %184 = vmatpush2.bf16.msra.mxu0 0
    %185 = vmatprep.subr.bf16.mxu0 0
    %186 = vmatpush2.bf16.msra.mxu0 0
    %187 = vmatprep.subr.bf16.mxu0 0
    %188 = vmatpush2.bf16.msra.mxu0 0
    %189 = vmatprep.subr.bf16.mxu0 0
    %190 = vmatpush2.bf16.msra.mxu0 0
    %191 = vmatprep.subr.bf16.mxu0 0
    %192 = vmatpush2.bf16.msra.mxu0 0
    %193 = vmatprep.subr.bf16.mxu0 0
    %194 = vmatpush2.bf16.msra.mxu0 0
    %195 = vmatprep.subr.bf16.mxu0 0
    %196 = vmatpush2.bf16.msra.mxu0 0
    %197 = vmatprep.subr.bf16.mxu0 0
    %198 = vmatpush2.bf16.msra.mxu0 0
    %199 = vmatprep.mubr.bf16.mxu0 0
    %200 = vmatmul.mubr.bf16.gmra.mxu0 %v85
    %v201 = vpop.f32.mrf.mxu0
    %v202 = vadd.f32 0.0, %v201
    %v203 = vpop.f32.mrf.mxu0
    %v204 = vadd.f32 0.0, %v203
    %v205 = vpop.f32.mrf.mxu0
    %v206 = vadd.f32 0.0, %v205
    %v207 = vpop.f32.mrf.mxu0
    %v208 = vadd.f32 0.0, %v207
    %209 = vdwg.mxu0
    %v210 = vmax.f32 %v202, 0.0
    %v211 = vmax.f32 %v206, 0.0
    %v212 = vmul.f32 %v210, %v204
    %v213 = vmul.f32 %v211, %v208
    %v214 = vld [vmem:[#allocation2] sm:$0xff]
    %v215 = vld [vmem:[#allocation2 + $0x8] sm:$0xff]
    %v216 = vpack.c.bf16 %v213, %v212
    %v217 = vld [vmem:[#allocation8] sm:$0xf]
    %v218 = vld [vmem:[#allocation8 + $0x4] sm:$0xf]
    %v219 = vld [vmem:[#allocation8 + $0x8] sm:$0xf]
    %v220 = vld [vmem:[#allocation8 + $0xc] sm:$0xf]
    %v221 = vld [vmem:[#allocation8 + $0x10] sm:$0xf]
    %v222 = vld [vmem:[#allocation8 + $0x14] sm:$0xf]
    %v223 = vld [vmem:[#allocation8 + $0x18] sm:$0xf]
    %v224 = vld [vmem:[#allocation8 + $0x1c] sm:$0xf]
    %v225 = vld [vmem:[#allocation8 + $0x20] sm:$0xf]
    %v226 = vld [vmem:[#allocation8 + $0x24] sm:$0xf]
    %v227 = vld [vmem:[#allocation8 + $0x28] sm:$0xf]
    %v228 = vld [vmem:[#allocation8 + $0x2c] sm:$0xf]
    %v229 = vld [vmem:[#allocation8 + $0x30] sm:$0xf]
    %v230 = vld [vmem:[#allocation8 + $0x34] sm:$0xf]
    %v231 = vld [vmem:[#allocation8 + $0x38] sm:$0xf]
    %v232 = vld [vmem:[#allocation8 + $0x3c] sm:$0xf]
    %v249 = vunpack.c.l.b16 %v217
    %v250 = vunpack.c.l.b16 %v218
    %v251 = vunpack.c.l.b16 %v219
    %v252 = vunpack.c.l.b16 %v220
    %v253 = vunpack.c.l.b16 %v221
    %v254 = vunpack.c.l.b16 %v222
    %v255 = vunpack.c.l.b16 %v223
    %v256 = vunpack.c.l.b16 %v224
    %v257 = vunpack.c.l.b16 %v225
    %v258 = vunpack.c.l.b16 %v226
    %v259 = vunpack.c.l.b16 %v227
    %v260 = vunpack.c.l.b16 %v228
    %v261 = vunpack.c.l.b16 %v229
    %v262 = vunpack.c.l.b16 %v230
    %v263 = vunpack.c.l.b16 %v231
    %v264 = vunpack.c.l.b16 %v232
    %v265 = vpack.c.b16 %v250, %v249
    %v266 = vpack.c.b16 %v252, %v251
    %v267 = vpack.c.b16 %v254, %v253
    %v268 = vpack.c.b16 %v256, %v255
    %v269 = vpack.c.b16 %v258, %v257
    %v270 = vpack.c.b16 %v260, %v259
    %v271 = vpack.c.b16 %v262, %v261
    %v272 = vpack.c.b16 %v264, %v263
    %281 = vmatprep.subr.bf16.mxu0 0
    %282 = vmatpush1.bf16.msra.mxu0 %v272
    %283 = vmatprep.subr.bf16.mxu0 0
    %284 = vmatpush1.bf16.msra.mxu0 %v271
    %285 = vmatprep.subr.bf16.mxu0 0
    %286 = vmatpush1.bf16.msra.mxu0 %v270
    %287 = vmatprep.subr.bf16.mxu0 0
    %288 = vmatpush1.bf16.msra.mxu0 %v269
    %289 = vmatprep.subr.bf16.mxu0 0
    %290 = vmatpush1.bf16.msra.mxu0 %v268
    %291 = vmatprep.subr.bf16.mxu0 0
    %292 = vmatpush1.bf16.msra.mxu0 %v267
    %293 = vmatprep.subr.bf16.mxu0 0
    %294 = vmatpush1.bf16.msra.mxu0 %v266
    %295 = vmatprep.subr.bf16.mxu0 0
    %296 = vmatpush1.bf16.msra.mxu0 %v265
    %297 = vmatprep.subr.bf16.mxu0 0
    %298 = vmatpush2.bf16.msra.mxu0 0
    %299 = vmatprep.subr.bf16.mxu0 0
    %300 = vmatpush2.bf16.msra.mxu0 0
    %301 = vmatprep.subr.bf16.mxu0 0
    %302 = vmatpush2.bf16.msra.mxu0 0
    %303 = vmatprep.subr.bf16.mxu0 0
    %304 = vmatpush2.bf16.msra.mxu0 0
    %305 = vmatprep.subr.bf16.mxu0 0
    %306 = vmatpush2.bf16.msra.mxu0 0
    %307 = vmatprep.subr.bf16.mxu0 0
    %308 = vmatpush2.bf16.msra.mxu0 0
    %309 = vmatprep.subr.bf16.mxu0 0
    %310 = vmatpush2.bf16.msra.mxu0 0
    %311 = vmatprep.subr.bf16.mxu0 0
    %312 = vmatpush2.bf16.msra.mxu0 0
    %313 = vmatprep.mubr.bf16.mxu0 0
    %314 = vmatmul.mubr.bf16.gmra.mxu0 %v216
    %v315 = vpop.f32.mrf.mxu0
    %v316 = vadd.f32 0.0, %v315
    %v317 = vpop.f32.mrf.mxu0
    %v318 = vpop.f32.mrf.mxu0
    %v319 = vadd.f32 0.0, %v318
    %v320 = vpop.f32.mrf.mxu0
    %321 = vdwg.mxu0
    %v322 = vadd.f32 %v214, %v316
    %v323 = vadd.f32 %v215, %v319
    %324 = vst [vmem:[#allocation2] sm:$0xff] %v322
    %325 = vst [vmem:[#allocation2 + $0x8] sm:$0xff] %v323
    // Predicated region
    $region30: #{tpu_custom_call.1} parent=1 // pred_check
      %p326 = pneg %p57
    $region31: #{tpu_custom_call.1} parent=1 // pred_check_branch
      %328 = sbr.rel (%p326) target = $region33
    $region32: #{tpu_custom_call.1} parent=1 // pred_region
      %v329 = vld [vmem:[#allocation2] sm:$0xff]
      %v330 = vld [vmem:[#allocation2 + $0x8] sm:$0xff]
      %331 = vst [vmem:[#allocation9] sm:$0xff] %v329
      %332 = vst [vmem:[#allocation9 + $0x8] sm:$0xff] %v330
    $region33: #{tpu_custom_call.1} parent=1 // pred_fallthru
      _
    // Predicated region
    $region34: #{tpu_custom_call.1} parent=1 // pred_check
      _
    $region35: #{tpu_custom_call.1} parent=1 // pred_check_branch
      %334 = sbr.rel (0) target = $region37
    $region36: #{tpu_custom_call.1} parent=1 // pred_region
      %s336 = ssub.s32 256, 256
      %337 = vsyncadd [#allocation5], %s336
      %s338 = sshll.u32 [#allocation9], 4
      %s339 = int_to_ptr.vmem [resolvable:$true] %s338
      %344 = dma.vmem_to_hbm [thread:$0]  %s339, 256, %s3, [#allocation5], 128, 128, 8
    $region37: #{tpu_custom_call.1} parent=1 // pred_fallthru
      _
    // Predicated region
    $region38: #{tpu_custom_call.1} parent=1 // pred_check
      _
    $region39: #{tpu_custom_call.1} parent=1 // pred_check_branch
      %346 = sbr.rel (0) target = $region41
    $region40: #{tpu_custom_call.1} parent=1 // pred_region
      %347 = dma.done [#allocation5], 256
    $region41: #{tpu_custom_call.1} parent=1 // pred_fallthru
      _
    %348 = vsyncpa [#allocation4], 1
    %349 = vsyncpa [#allocation7], 1
    %350 = vsyncpa [#allocation5], 1

</llo_original>
